<compile_context>
chip_gen: v7x
topology: tpu7x:2x2x1
jax: 0.10.0
libtpu: 0.0.40
codegen_flags: <defaults>
</compile_context>

<pallas_src>
import jax
import jax.numpy as jnp
import numpy as np
from jax.experimental import pallas as pl
from jax.experimental.pallas import tpu as pltpu

_LANE = 128
_SUBLANE = 8
_EPS = 1e-10


def _round_up(n, m):
    return ((n + m - 1) // m) * m


# ---------------------------------------------------------------------------
# Kernel: one MXU matmul on the folded weight (resident in VMEM), bias add,
# ReLU, +eps, then a narrow [tile_b, 3] store (exact head width -> minimal
# HBM writeback). a/b/alpha become free column slices in the wrapper.
# ---------------------------------------------------------------------------
def _evidence_kernel(x_ref, w_ref, b_ref, out_ref):
    beta = (
        jnp.dot(x_ref[...], w_ref[...], preferred_element_type=jnp.float32)
        + b_ref[...]
    )                                             # [TB, 128] f32 accumulation
    beta = jnp.maximum(beta, 0.0) + _EPS
    out_ref[...] = beta[:, : out_ref.shape[-1]]   # [TB, 3] store


# ---------------------------------------------------------------------------
# One-time parameter prep (outside the kernel):
#   * fold hidden_nn -> multi_hidden[0..3] -> beta_nn into one affine map
#     (done in float64; valid because the chain has no nonlinearities),
#   * zero-pad the 3-wide head to 128 lanes (exact numerical no-op),
#   * cast the weight to the MXU operand dtype (bias stays f32).
# ---------------------------------------------------------------------------
def prepare_params(params, *, compute_dtype=jnp.float32):
    def w64(a):
        return np.asarray(a, dtype=np.float64)

    w_h, b_h = params["hidden"]
    w_fold = w64(w_h)
    b_fold = w64(b_h).reshape(1, -1)
    for w, b in params["multi"]:
        wi = w64(w)
        w_fold = w_fold @ wi
        b_fold = b_fold @ wi + w64(b).reshape(1, -1)
    w_beta, b_beta = params["beta"]
    wb = w64(w_beta)
    w_fold = w_fold @ wb
    b_fold = b_fold @ wb + w64(b_beta).reshape(1, -1)

    l_dim, n_out = w_fold.shape                      # (l_dim, 3)
    out_pad = _round_up(n_out, _LANE)
    w_p = np.zeros((l_dim, out_pad), np.float64)
    w_p[:, :n_out] = w_fold
    b_p = np.zeros((1, out_pad), np.float64)
    b_p[:, :n_out] = b_fold

    return {
        "w": jnp.asarray(w_p, dtype=compute_dtype),   # MXU operand dtype
        "b": jnp.asarray(b_p, dtype=jnp.float32),     # bias stays f32
        "n_out": int(n_out),
    }


def evidence_encoder_forward(x, prepared, *, tile_b=512):
    """x: [batch, l_dim] float32. `prepared` comes from prepare_params."""
    batch, l_dim = x.shape
    w, b = prepared["w"], prepared["b"]
    n_out = prepared["n_out"]
    assert w.shape[0] == l_dim

    # Tile selection: big tiles amortize the ~0.35 us per-grid-step overhead.
    # If the whole batch fits in one tile, split into 2 steps (when batch is
    # large enough) so the "parallel" grid axis feeds both v7x TensorCores.
    tile_b = _round_up(max(int(tile_b), _SUBLANE), _SUBLANE)
    if batch <= tile_b:
        if batch >= 2 * _SUBLANE:
            tile_b = _round_up(pl.cdiv(batch, 2), _SUBLANE)
        else:
            tile_b = batch            # tiny batch: single (full-dim) block
    grid = (pl.cdiv(batch, tile_b),)

    # Pre-cast x once in the wrapper (halves the streamed DMA on bf16 path).
    x = x.astype(w.dtype)

    in_specs = [
        pl.BlockSpec((tile_b, l_dim), lambda i: (i, 0)),   # streamed per step
        pl.BlockSpec(w.shape, lambda i: (0, 0)),           # resident weight
        pl.BlockSpec(b.shape, lambda i: (0, 0)),           # resident bias
    ]
    out_spec = pl.BlockSpec((tile_b, n_out), lambda i: (i, 0))
    out_shape = jax.ShapeDtypeStruct((batch, n_out), jnp.float32)

    flops = 2 * batch * l_dim * int(w.shape[1])            # actual kernel work
    bytes_accessed = (
        batch * l_dim * x.dtype.itemsize
        + int(w.size) * w.dtype.itemsize
        + int(b.size) * b.dtype.itemsize
        + batch * n_out * 4
    )

    beta = pl.pallas_call(
        _evidence_kernel,
        grid=grid,
        in_specs=in_specs,
        out_specs=out_spec,
        out_shape=out_shape,
        compiler_params=pltpu.CompilerParams(
            dimension_semantics=("parallel",),   # megacore / v7x 2-TC sharding
        ),
        cost_estimate=pl.CostEstimate(
            flops=int(flops), transcendentals=0, bytes_accessed=int(bytes_accessed)
        ),
    )(x, w, b)

    # [batch, 3] -> three [batch, 1] heads; wrapper slices are free.
    return beta[:, 0:1], beta[:, 1:2], beta[:, 2:3]


def init_params(key, l_dim, hidden_dim):
    """Deterministic synthetic parameter init (not a checkpoint load)."""
    dims = [
        ("hidden", l_dim, hidden_dim),
        ("m0", hidden_dim, 512),
        ("m1", 512, 256),
        ("m2", 256, 128),
        ("m3", 128, hidden_dim),
        ("beta", hidden_dim, 3),
    ]
    params = {}
    multi = []
    for name, din, dout in dims:
        key, kw, kb = jax.random.split(key, 3)
        scale = 1.0 / jnp.sqrt(jnp.float32(din))
        w = jax.random.uniform(kw, (din, dout), jnp.float32, -scale, scale)
        b = jax.random.uniform(kb, (1, dout), jnp.float32, -scale, scale)
        if name == "hidden":
            params["hidden"] = (w, b)
        elif name == "beta":
            params["beta"] = (w, b)
        else:
            multi.append((w, b))
    params["multi"] = tuple(multi)
    return params


def reference_forward(x, params):
    """Plain-JAX reference matching the PyTorch forward (layer by layer)."""
    (w_h, b_h) = params["hidden"]
    h = x @ w_h + b_h
    for w, b in params["multi"]:
        h = h @ w + b
    (w_beta, b_beta) = params["beta"]
    beta = jnp.maximum(h @ w_beta + b_beta, 0.0) + _EPS
    return beta[:, 0:1], beta[:, 1:2], beta[:, 2:3]


if __name__ == "__main__":
    key = jax.random.PRNGKey(0)
    L_DIM, HIDDEN_DIM = 32, 32
    BATCH = 200  # NOT a multiple of the tile -> exercises the ragged/masked path

    key, kx, kp = jax.random.split(key, 3)
    x = jax.random.normal(kx, (BATCH, L_DIM), dtype=jnp.float32)
    params = init_params(kp, L_DIM, HIDDEN_DIM)

    ag_r, bg_r, alphag_r = reference_forward(x, params)

    # f32 operands: exactness default on every generation.
    prep32 = prepare_params(params, compute_dtype=jnp.float32)
    ag, bg, alphag = evidence_encoder_forward(x, prep32, tile_b=512)
    jax.block_until_ready((ag, bg, alphag))
    assert ag.shape == (BATCH, 1) and bg.shape == (BATCH, 1) and alphag.shape == (BATCH, 1)
    assert jnp.allclose(ag, ag_r, atol=1e-4, rtol=1e-4)
    assert jnp.allclose(bg, bg_r, atol=1e-4, rtol=1e-4)
    assert jnp.allclose(alphag, alphag_r, atol=1e-4, rtol=1e-4)

    # bf16 operands (MXU fast path on v5e/v6e/v7x), f32 accumulation in-kernel.
    prep16 = prepare_params(params, compute_dtype=jnp.bfloat16)
    ag16, bg16, alphag16 = evidence_encoder_forward(x, prep16, tile_b=512)
    jax.block_until_ready((ag16, bg16, alphag16))
    assert bool(jnp.all(jnp.isfinite(ag16)))
    assert bool(jnp.all(jnp.isfinite(bg16)))
    assert bool(jnp.all(jnp.isfinite(alphag16)))
    assert jnp.allclose(ag16, ag_r, atol=1e-2, rtol=1e-1)
    assert jnp.allclose(bg16, bg_r, atol=1e-2, rtol=1e-1)
    assert jnp.allclose(alphag16, alphag_r, atol=1e-2, rtol=1e-1)

    print("KERNEL_OK")
</pallas_src>

<mosaic_0001>
module attributes {stable_mosaic.version = 11 : i64} {
  func.func @_evidence_kernel(%arg0: i32, %arg1: memref<104x32xf32, #tpu.memory_space<vmem>>, %arg2: memref<32x128xf32, #tpu.memory_space<vmem>>, %arg3: memref<1x128xf32, #tpu.memory_space<vmem>>, %arg4: memref<104x3xf32, #tpu.memory_space<vmem>>) attributes {dimension_semantics = [#tpu.dimension_semantics<parallel>], iteration_bounds = array<i64: 2>, scalar_prefetch = 0 : i64, scratch_operands = 0 : i64, tpu.core_type = #tpu.core_type<tc>, window_params = [{transform_indices = @transform_0, window_bounds = array<i64: 104, 32>}, {pipeline_mode = #tpu.pipeline_mode<synchronous>, transform_indices = @transform_1, window_bounds = array<i64: 32, 128>}, {pipeline_mode = #tpu.pipeline_mode<synchronous>, transform_indices = @transform_2, window_bounds = array<i64: 1, 128>}, {transform_indices = @transform_3, window_bounds = array<i64: 104, 3>}]} {
    %c0 = arith.constant 0 : index
    %c0_0 = arith.constant 0 : index
    %0 = vector.load %arg1[%c0, %c0_0] : memref<104x32xf32, #tpu.memory_space<vmem>>, vector<104x32xf32>
    %c0_1 = arith.constant 0 : index
    %c0_2 = arith.constant 0 : index
    %1 = vector.load %arg2[%c0_1, %c0_2] : memref<32x128xf32, #tpu.memory_space<vmem>>, vector<32x128xf32>
    %cst = arith.constant dense<0.000000e+00> : vector<104x128xf32>
    %2 = tpu.matmul %0, %1, %cst {dimension_numbers = #tpu.dot_dimension_numbers<[1], [0], [0], [1], [0, 0, 1, 1], [], []>} : vector<104x32xf32>, vector<32x128xf32>, vector<104x128xf32> -> vector<104x128xf32>
    %c0_3 = arith.constant 0 : index
    %c0_4 = arith.constant 0 : index
    %3 = vector.load %arg3[%c0_3, %c0_4] : memref<1x128xf32, #tpu.memory_space<vmem>>, vector<1x128xf32>
    %4 = vector.broadcast %3 : vector<1x128xf32> to vector<104x128xf32>
    %5 = arith.addf %2, %4 : vector<104x128xf32>
    %cst_5 = arith.constant 0.000000e+00 : f32
    %6 = vector.broadcast %cst_5 : f32 to vector<104x128xf32>
    %7 = arith.maximumf %5, %6 : vector<104x128xf32>
    %cst_6 = arith.constant 1.000000e-10 : f32
    %8 = vector.broadcast %cst_6 : f32 to vector<104x128xf32>
    %9 = arith.addf %7, %8 : vector<104x128xf32>
    %10 = vector.extract_strided_slice %9 {offsets = [0, 0], sizes = [104, 3], strides = [1, 1]} : vector<104x128xf32> to vector<104x3xf32>
    %c0_7 = arith.constant 0 : index
    %c0_8 = arith.constant 0 : index
    %11 = vector.load %arg4[%c0_7, %c0_8] : memref<104x3xf32, #tpu.memory_space<vmem>>, vector<104x3xf32>
    tpu.vector_store %arg4[%c0_7, %c0_8], %10 {strides = array<i32>} : memref<104x3xf32, #tpu.memory_space<vmem>>, vector<104x3xf32>,
    return
  }
  func.func @transform_0(%arg0: i32) -> (i32, i32) {
    %c0_i32 = arith.constant 0 : i32
    %c0_i32_0 = arith.constant 0 : i32
    return %arg0, %c0_i32 : i32, i32
  }
  func.func @transform_1(%arg0: i32) -> (i32, i32) {
    %c0_i32 = arith.constant 0 : i32
    %c0_i32_0 = arith.constant 0 : i32
    %c0_i32_1 = arith.constant 0 : i32
    return %c0_i32, %c0_i32_0 : i32, i32
  }
  func.func @transform_2(%arg0: i32) -> (i32, i32) {
    %c0_i32 = arith.constant 0 : i32
    %c0_i32_0 = arith.constant 0 : i32
    %c0_i32_1 = arith.constant 0 : i32
    return %c0_i32, %c0_i32_0 : i32, i32
  }
  func.func @transform_3(%arg0: i32) -> (i32, i32) {
    %c0_i32 = arith.constant 0 : i32
    %c0_i32_0 = arith.constant 0 : i32
    return %arg0, %c0_i32 : i32, i32
  }
}

</mosaic_0001>

<llo_original>
// kernel: tpu_custom_call.1
$region0: #{tpu_custom_call.1}
  #allocation0 [shape = 'u32[]', space=smem, size = 0x4, offset = 0x4, fixed_abs, tag = 'smem constant byte address 0x4 - core index']
  #allocation1 [shape = 'u32[144,128]{1,0:T(1,128)}', space=vmem, size = 0x12000, scoped, tag = 'internal scratch']
  %s0 = inlined_call_operand.vmem [shape: f32[200,32], index: 0, kind: input, shape index: {}]
  %s1 = inlined_call_operand.vmem [shape: f32[32,128], index: 1, kind: input, shape index: {}]
  %s2 = inlined_call_operand.vmem [shape: f32[1,128], index: 2, kind: input, shape index: {}]
  %s3 = inlined_call_operand.vmem [shape: f32[200,3], index: 3, kind: output, shape index: {}]
  %s4 = sld [smem:[#allocation0]]
  $region93: #{tpu_custom_call.1} parent=0
    _
  %s6 = ssub.s32 1, %s4
  %s7 = scalar_select 0, %s6, %s4
  $region1: #{tpu_custom_call.1} parent=0
    #allocation2 [shape = 'u8[106496]{0}', space=vmem, size = 0x1a000, scoped, tag = 'output window, operand 0']
    loop: start=0, step=1, limit=4
    $region2: #{tpu_custom_call.1} parent=1 // loop_pre_header
      _
    $region3: #{tpu_custom_call.1} parent=1 // loop_header
      %s9 = sphi 0, %s13
      %p10 = scmp.ge.s32.totalorder %s9, 4
      %s19 = sphi 0, %s21
      %s22 = sphi 0, %s19
      %s23 = sphi 0, %s22
      %s39 = sphi 0, %s23
      %s43 = sphi 0, %s43
      %s45 = sphi 0, %s43
      %s46 = sphi 0, %s45
      %s60 = sphi 0, %s46
      %s64 = sphi 0, %s64
      %s66 = sphi 0, %s64
      %s67 = sphi 0, %s66
      %s81 = sphi 0, %s67
      %s87 = sphi 0, %s89
      %s90 = sphi 0, %s87
      %s91 = sphi 0, %s90
      %s107 = sphi 0, %s91
    $region4: #{tpu_custom_call.1} parent=1 // loop_header_branch
      %12 = sbr.rel (%p10) target = $region8
    $region5: #{tpu_custom_call.1} parent=1 // loop_body
      %s14 = ssub.s32 %s9, 1
      %s15 = ssub.s32 %s9, 2
      %s16 = sadd.s32 %s9, 1
      %s17 = ssub.s32 %s9, %s16
      %p18 = scmp.eq.s32.totalorder %s17, 0
      %s20 = sadd.s32 %s19, 1
      %s21 = scalar_select %p18, %s19, %s20
      %p24 = pneg %p18
      %p25 = scmp.eq.s32.totalorder %s9, 1
      %p26 = por %p24, %p25
      %p27 = scmp.ne.s32.totalorder %s19, %s22
      %p28 = scmp.eq.s32.totalorder %s9, 0
      %p29 = por %p27, %p28
      %p30 = scmp.ne.s32.totalorder %s19, %s22
      %p31 = scmp.eq.s32.totalorder %s14, 1
      %p32 = por %p30, %p31
      %p33 = scmp.ne.s32.totalorder %s22, %s23
      %p34 = scmp.eq.s32.totalorder %s14, 0
      %p35 = por %p33, %p34
      %p36 = scmp.ne.s32.totalorder %s22, %s23
      %p37 = scmp.eq.s32.totalorder %s15, 1
      %p38 = por %p36, %p37
      %p40 = scmp.ne.s32.totalorder %s23, %s39
      %p41 = scmp.eq.s32.totalorder %s15, 0
      %p42 = por %p40, %p41
      %s44 = sadd.s32 %s43, 1
      %p47 = scmp.eq.s32.totalorder %s9, 1
      %p48 = scmp.ne.s32.totalorder %s43, %s45
      %p49 = scmp.eq.s32.totalorder %s9, 0
      %p50 = por %p48, %p49
      %p51 = scmp.ne.s32.totalorder %s43, %s45
      %p52 = scmp.eq.s32.totalorder %s14, 1
      %p53 = por %p51, %p52
      %p54 = scmp.ne.s32.totalorder %s45, %s46
      %p55 = scmp.eq.s32.totalorder %s14, 0
      %p56 = por %p54, %p55
      %p57 = scmp.ne.s32.totalorder %s45, %s46
      %p58 = scmp.eq.s32.totalorder %s15, 1
      %p59 = por %p57, %p58
      %p61 = scmp.ne.s32.totalorder %s46, %s60
      %p62 = scmp.eq.s32.totalorder %s15, 0
      %p63 = por %p61, %p62
      %s65 = sadd.s32 %s64, 1
      %p68 = scmp.eq.s32.totalorder %s9, 1
      %p69 = scmp.ne.s32.totalorder %s64, %s66
      %p70 = scmp.eq.s32.totalorder %s9, 0
      %p71 = por %p69, %p70
      %p72 = scmp.ne.s32.totalorder %s64, %s66
      %p73 = scmp.eq.s32.totalorder %s14, 1
      %p74 = por %p72, %p73
      %p75 = scmp.ne.s32.totalorder %s66, %s67
      %p76 = scmp.eq.s32.totalorder %s14, 0
      %p77 = por %p75, %p76
      %p78 = scmp.ne.s32.totalorder %s66, %s67
      %p79 = scmp.eq.s32.totalorder %s15, 1
      %p80 = por %p78, %p79
      %p82 = scmp.ne.s32.totalorder %s67, %s81
      %p83 = scmp.eq.s32.totalorder %s15, 0
      %p84 = por %p82, %p83
      %s85 = ssub.s32 %s9, %s16
      %p86 = scmp.eq.s32.totalorder %s85, 0
      %s88 = sadd.s32 %s87, 1
      %s89 = scalar_select %p86, %s87, %s88
      %p92 = pneg %p86
      %p93 = scmp.eq.s32.totalorder %s9, 1
      %p94 = por %p92, %p93
      %p95 = scmp.ne.s32.totalorder %s87, %s90
      %p96 = scmp.eq.s32.totalorder %s9, 0
      %p97 = por %p95, %p96
      %p98 = scmp.ne.s32.totalorder %s87, %s90
      %p99 = scmp.eq.s32.totalorder %s14, 1
      %p100 = por %p98, %p99
      %p101 = scmp.ne.s32.totalorder %s90, %s91
      %p102 = scmp.eq.s32.totalorder %s14, 0
      %p103 = por %p101, %p102
      %p104 = scmp.ne.s32.totalorder %s90, %s91
      %p105 = scmp.eq.s32.totalorder %s15, 1
      %p106 = por %p104, %p105
      %p108 = scmp.ne.s32.totalorder %s91, %s107
      %p109 = scmp.eq.s32.totalorder %s15, 0
      %p110 = por %p108, %p109
      %p111 = scmp.le.s32.totalorder 1, %s9
      %p112 = scmp.lt.s32.totalorder %s9, 3
      %p113 = pnand %p111, %p112
      %p114 = pneg %p113
      // Predicated region
      $region9: #{tpu_custom_call.1} parent=5 // pred_check
        _
      $region10: #{tpu_custom_call.1} parent=5 // pred_check_branch
        %116 = sbr.rel (%p113) target = $region12
      $region11: #{tpu_custom_call.1} parent=5 // pred_region
        %s117 = ssub.s32 %s9, 1
        // Predicated region
        $region13: #{tpu_custom_call.1} parent=11 // pred_check
          %p118 = pneg %p56
        $region14: #{tpu_custom_call.1} parent=11 // pred_check_branch
          %120 = sbr.rel (%p118) target = $region16
        $region15: #{tpu_custom_call.1} parent=11 // pred_region
          _
        $region16: #{tpu_custom_call.1} parent=11 // pred_fallthru
          _
        // Predicated region
        $region17: #{tpu_custom_call.1} parent=11 // pred_check
          %p121 = pneg %p77
        $region18: #{tpu_custom_call.1} parent=11 // pred_check_branch
          %123 = sbr.rel (%p121) target = $region20
        $region19: #{tpu_custom_call.1} parent=11 // pred_region
          _
        $region20: #{tpu_custom_call.1} parent=11 // pred_fallthru
          _
      $region12: #{tpu_custom_call.1} parent=5 // pred_fallthru
        _
      %p124 = scmp.lt.s32.totalorder %s9, 2
      // Predicated region
      $region21: #{tpu_custom_call.1} parent=5 // pred_check
        %p125 = pneg %p124
      $region22: #{tpu_custom_call.1} parent=5 // pred_check_branch
        %127 = sbr.rel (%p125) target = $region24
      $region23: #{tpu_custom_call.1} parent=5 // pred_region
        // Predicated region
        $region25: #{tpu_custom_call.1} parent=23 // pred_check
          %p128 = pneg %p29
        $region26: #{tpu_custom_call.1} parent=23 // pred_check_branch
          %130 = sbr.rel (%p128) target = $region28
        $region27: #{tpu_custom_call.1} parent=23 // pred_region
          %s131 = smul.u32 13, %s9
          %s132 = ssub.s32 25, %s131
          %p133 = scmp.lt.s32.totalorder %s132, 13
          %s134 = scalar_select %p133, %s132, 13
          %s135 = smul.u32 128, %s134
          %p136 = scmp.lt.s32.totalorder %s131, 24
          %s137 = scalar_select %p136, %s131, 24
          %s138 = smul.addr %s137, 8
          %s139 = scalar_lea.vmem %s0, %s138
          %s140 = smul.u32 13, %s9
          %s141 = ssub.s32 25, %s140
          %p142 = scmp.lt.s32.totalorder %s141, 13
          %s143 = scalar_select %p142, %s141, 13
          %s144 = smul.u32 128, %s143
        $region28: #{tpu_custom_call.1} parent=23 // pred_fallthru
          _
      $region24: #{tpu_custom_call.1} parent=5 // pred_fallthru
        _
      %p145 = scmp.le.s32.totalorder 1, %s9
      %p146 = scmp.lt.s32.totalorder %s9, 3
      %p147 = pnand %p145, %p146
      %p148 = pneg %p147
      // Predicated region
      $region29: #{tpu_custom_call.1} parent=5 // pred_check
        _
      $region30: #{tpu_custom_call.1} parent=5 // pred_check_branch
        %150 = sbr.rel (%p147) target = $region32
      $region31: #{tpu_custom_call.1} parent=5 // pred_region
        %s151 = ssub.s32 %s9, 1
        %s152 = smul.u32 13, %s14
        %s153 = ssub.s32 25, %s152
        %p154 = scmp.lt.s32.totalorder %s153, 13
        %s155 = scalar_select %p154, %s153, 13
        %s156 = smul.u32 128, %s155
        %p157 = scmp.lt.s32.totalorder %s152, 24
        %s158 = scalar_select %p157, %s152, 24
        %s159 = smul.addr %s158, 8
        %s160 = scalar_lea.vmem %s0, %s159
        %p161 = pneg %p35
        %p162 = pneg %p32
        %p163 = pneg %p56
        %p164 = pneg %p53
        %p165 = pneg %p77
        %p166 = pneg %p74
        %p167 = pneg %p103
        %p168 = pneg %p100
        %s169 = sand.u32 %s90, 1
        %s170 = sand.u32 %s90, 1
        %s171 = smul.addr %s170, 104
        %s172 = scalar_lea.vmem [#allocation2], %s171
        %s173 = smul.u32 13, %s14
        %s174 = ssub.s32 25, %s173
        %p175 = scmp.lt.s32.totalorder %s174, 13
        %s176 = scalar_select %p175, %s174, 13
        %s177 = smul.u32 128, %s176
        %p178 = scmp.lt.s32.totalorder %s173, 24
        %s179 = scalar_select %p178, %s173, 24
        %s180 = smul.addr %s179, 8
        %s181 = scalar_lea.vmem %s0, %s180
        %s182 = smul.u32 13, %s14
        %s183 = ssub.s32 25, %s182
        %p184 = scmp.lt.s32.totalorder %s183, 13
        %s185 = scalar_select %p184, %s183, 13
        %s186 = smul.u32 128, %s185
        %s187 = smul.u32 13, %s14
        %s188 = ssub.s32 25, %s187
        %p189 = scmp.lt.s32.totalorder %s188, 13
        %s190 = scalar_select %p189, %s188, 13
        %s191 = smul.u32 128, %s190
        %v192 = vld [vmem:[%s181] sm:$0xff]
        %v193 = vld [vmem:[%s181 + $0x8] sm:$0xff]
        %v194 = vld [vmem:[%s181 + $0x10] sm:$0xff]
        %v195 = vld [vmem:[%s181 + $0x18] sm:$0xff]
        %v196 = vld [vmem:[%s181 + $0x20] sm:$0xff]
        %v197 = vld [vmem:[%s181 + $0x28] sm:$0xff]
        %v198 = vld [vmem:[%s181 + $0x30] sm:$0xff]
        %v199 = vld [vmem:[%s181 + $0x38] sm:$0xff]
        %v200 = vld [vmem:[%s181 + $0x40] sm:$0xff]
        %v201 = vld [vmem:[%s181 + $0x48] sm:$0xff]
        %v202 = vld [vmem:[%s181 + $0x50] sm:$0xff]
        %v203 = vld [vmem:[%s181 + $0x58] sm:$0xff]
        %v204 = vld [vmem:[%s181 + $0x60] sm:$0xff]
        %v205 = vld [vmem:[%s1] sm:$0xff]
        %v206 = vld [vmem:[%s1 + $0x8] sm:$0xff]
        %v207 = vld [vmem:[%s1 + $0x10] sm:$0xff]
        %v208 = vld [vmem:[%s1 + $0x18] sm:$0xff]
        %v209 = vld [vmem:[%s2] sm:$0x1]
        %v211 = vlaneseq
        %v212 = vshrl.u32 %v211, 7
        %v213 = vsub.s32 0, %v212
        %v214 = vrot.slane %v209, %v213
        %vm216 = vcmask 261120
        %v218 = vsel %vm216, %v192, 0
        %v221 = vsel %vm216, %v193, 0
        %v224 = vsel %vm216, %v194, 0
        %v227 = vsel %vm216, %v195, 0
        %v230 = vsel %vm216, %v196, 0
        %v233 = vsel %vm216, %v197, 0
        %v236 = vsel %vm216, %v198, 0
        %v239 = vsel %vm216, %v199, 0
        %v242 = vsel %vm216, %v200, 0
        %v245 = vsel %vm216, %v201, 0
        %v248 = vsel %vm216, %v202, 0
        %v251 = vsel %vm216, %v203, 0
        %v254 = vsel %vm216, %v204, 0
        %256 = vmatprep.subr.mxu0 0.0
        %257 = vmatpush1.msra.mxu0 %v205
        %258 = vmatprep.subr.mxu0 0.0
        %259 = vmatpush1.msra.mxu0 %v206
        %260 = vmatprep.subr.mxu0 0.0
        %261 = vmatpush1.msra.mxu0 %v207
        %262 = vmatprep.subr.mxu0 0.0
        %263 = vmatpush1.msra.mxu0 %v208
        %264 = vmatprep.subr.mxu0 0.0
        %265 = vmatpush1.msra.mxu0 0.0
        %266 = vmatprep.subr.mxu0 0.0
        %267 = vmatpush1.msra.mxu0 0.0
        %268 = vmatprep.subr.mxu0 0.0
        %269 = vmatpush1.msra.mxu0 0.0
        %270 = vmatprep.subr.mxu0 0.0
        %271 = vmatpush1.msra.mxu0 0.0
        %272 = vmatprep.subr.mxu0 0.0
        %273 = vmatpush1.msra.mxu0 0.0
        %274 = vmatprep.subr.mxu0 0.0
        %275 = vmatpush1.msra.mxu0 0.0
        %276 = vmatprep.subr.mxu0 0.0
        %277 = vmatpush1.msra.mxu0 0.0
        %278 = vmatprep.subr.mxu0 0.0
        %279 = vmatpush1.msra.mxu0 0.0
        %280 = vmatprep.subr.mxu0 0.0
        %281 = vmatpush1.msra.mxu0 0.0
        %282 = vmatprep.subr.mxu0 0.0
        %283 = vmatpush1.msra.mxu0 0.0
        %284 = vmatprep.subr.mxu0 0.0
        %285 = vmatpush1.msra.mxu0 0.0
        %286 = vmatprep.subr.mxu0 0.0
        %287 = vmatpush1.msra.mxu0 0.0
        %288 = vmatprep.subr.mxu0 0.0
        %289 = vmatpush1.msra.mxu0 0.0
        %290 = vmatprep.subr.mxu0 0.0
        %291 = vmatpush1.msra.mxu0 0.0
        %292 = vmatprep.subr.mxu0 0.0
        %293 = vmatpush1.msra.mxu0 0.0
        %294 = vmatprep.subr.mxu0 0.0
        %295 = vmatpush1.msra.mxu0 0.0
        %296 = vmatprep.subr.mxu0 0.0
        %297 = vmatpush1.msra.mxu0 0.0
        %298 = vmatprep.subr.mxu0 0.0
        %299 = vmatpush1.msra.mxu0 0.0
        %300 = vmatprep.subr.mxu0 0.0
        %301 = vmatpush1.msra.mxu0 0.0
        %302 = vmatprep.subr.mxu0 0.0
        %303 = vmatpush1.msra.mxu0 0.0
        %304 = vmatprep.subr.mxu0 0.0
        %305 = vmatpush1.msra.mxu0 0.0
        %306 = vmatprep.subr.mxu0 0.0
        %307 = vmatpush1.msra.mxu0 0.0
        %308 = vmatprep.subr.mxu0 0.0
        %309 = vmatpush1.msra.mxu0 0.0
        %310 = vmatprep.subr.mxu0 0.0
        %311 = vmatpush1.msra.mxu0 0.0
        %312 = vmatprep.subr.mxu0 0.0
        %313 = vmatpush1.msra.mxu0 0.0
        %314 = vmatprep.subr.mxu0 0.0
        %315 = vmatpush1.msra.mxu0 0.0
        %316 = vmatprep.subr.mxu0 0.0
        %317 = vmatpush1.msra.mxu0 0.0
        %318 = vmatprep.subr.mxu0 0.0
        %319 = vmatpush1.msra.mxu0 0.0
        %320 = vmatprep.mubr.f32.mxu0 0.0
        %321 = vmatmul.mubr.f32.gmra.mrb[0].mxu0 %v218
        %v322 = vpop.f32.mrb[0].mxu0
        %v323 = vadd.f32 %v214, %v322
        %v324 = vpop.f32.mrb[0].mxu0
        %325 = vmatprep.mubr.f32.mxu0 0.0
        %326 = vmatmul.mubr.f32.gmra.mrb[0].mxu0 %v221
        %v327 = vpop.f32.mrb[0].mxu0
        %v328 = vadd.f32 %v214, %v327
        %v329 = vpop.f32.mrb[0].mxu0
        %330 = vmatprep.mubr.f32.mxu0 0.0
        %331 = vmatmul.mubr.f32.gmra.mrb[0].mxu0 %v224
        %v332 = vpop.f32.mrb[0].mxu0
        %v333 = vadd.f32 %v214, %v332
        %v334 = vpop.f32.mrb[0].mxu0
        %335 = vmatprep.mubr.f32.mxu0 0.0
        %336 = vmatmul.mubr.f32.gmra.mrb[0].mxu0 %v227
        %v337 = vpop.f32.mrb[0].mxu0
        %v338 = vadd.f32 %v214, %v337
        %v339 = vpop.f32.mrb[0].mxu0
        %340 = vmatprep.mubr.f32.mxu0 0.0
        %341 = vmatmul.mubr.f32.gmra.mrb[0].mxu0 %v230
        %v342 = vpop.f32.mrb[0].mxu0
        %v343 = vadd.f32 %v214, %v342
        %v344 = vpop.f32.mrb[0].mxu0
        %345 = vmatprep.mubr.f32.mxu0 0.0
        %346 = vmatmul.mubr.f32.gmra.mrb[0].mxu0 %v233
        %v347 = vpop.f32.mrb[0].mxu0
        %v348 = vadd.f32 %v214, %v347
        %v349 = vpop.f32.mrb[0].mxu0
        %350 = vmatprep.mubr.f32.mxu0 0.0
        %351 = vmatmul.mubr.f32.gmra.mrb[0].mxu0 %v236
        %v352 = vpop.f32.mrb[0].mxu0
        %v353 = vadd.f32 %v214, %v352
        %v354 = vpop.f32.mrb[0].mxu0
        %355 = vmatprep.mubr.f32.mxu0 0.0
        %356 = vmatmul.mubr.f32.gmra.mrb[0].mxu0 %v239
        %v357 = vpop.f32.mrb[0].mxu0
        %v358 = vadd.f32 %v214, %v357
        %v359 = vpop.f32.mrb[0].mxu0
        %360 = vmatprep.mubr.f32.mxu0 0.0
        %361 = vmatmul.mubr.f32.gmra.mrb[0].mxu0 %v242
        %v362 = vpop.f32.mrb[0].mxu0
        %v363 = vadd.f32 %v214, %v362
        %v364 = vpop.f32.mrb[0].mxu0
        %365 = vmatprep.mubr.f32.mxu0 0.0
        %366 = vmatmul.mubr.f32.gmra.mrb[0].mxu0 %v245
        %v367 = vpop.f32.mrb[0].mxu0
        %v368 = vadd.f32 %v214, %v367
        %v369 = vpop.f32.mrb[0].mxu0
        %370 = vmatprep.mubr.f32.mxu0 0.0
        %371 = vmatmul.mubr.f32.gmra.mrb[0].mxu0 %v248
        %v372 = vpop.f32.mrb[0].mxu0
        %v373 = vadd.f32 %v214, %v372
        %v374 = vpop.f32.mrb[0].mxu0
        %375 = vmatprep.mubr.f32.mxu0 0.0
        %376 = vmatmul.mubr.f32.gmra.mrb[0].mxu0 %v251
        %v377 = vpop.f32.mrb[0].mxu0
        %v378 = vadd.f32 %v214, %v377
        %v379 = vpop.f32.mrb[0].mxu0
        %380 = vmatprep.mubr.f32.mxu0 0.0
        %381 = vmatmul.mubr.f32.gmra.mrb[0].mxu0 %v254
        %v382 = vpop.f32.mrb[0].mxu0
        %v383 = vadd.f32 %v214, %v382
        %v384 = vpop.f32.mrb[0].mxu0
        %385 = vdwg.mxu0
        %v386 = vmax.f32 %v323, 0.0
        %v387 = vmax.f32 %v328, 0.0
        %v388 = vmax.f32 %v333, 0.0
        %v389 = vmax.f32 %v338, 0.0
        %v390 = vmax.f32 %v343, 0.0
        %v391 = vmax.f32 %v348, 0.0
        %v392 = vmax.f32 %v353, 0.0
        %v393 = vmax.f32 %v358, 0.0
        %v394 = vmax.f32 %v363, 0.0
        %v395 = vmax.f32 %v368, 0.0
        %v396 = vmax.f32 %v373, 0.0
        %v397 = vmax.f32 %v378, 0.0
        %v398 = vmax.f32 %v383, 0.0
        %v399 = vadd.f32 %v386, 1e-10
        %v400 = vadd.f32 %v387, 1e-10
        %v401 = vadd.f32 %v388, 1e-10
        %v402 = vadd.f32 %v389, 1e-10
        %v403 = vadd.f32 %v390, 1e-10
        %v404 = vadd.f32 %v391, 1e-10
        %v405 = vadd.f32 %v392, 1e-10
        %v406 = vadd.f32 %v393, 1e-10
        %v407 = vadd.f32 %v394, 1e-10
        %v408 = vadd.f32 %v395, 1e-10
        %v409 = vadd.f32 %v396, 1e-10
        %v410 = vadd.f32 %v397, 1e-10
        %v411 = vadd.f32 %v398, 1e-10
        %vm412 = vcmask 23552
        %413 = vst.msk [vmem:[%s172] sm:$0xff] %vm412, %v399
        %414 = vst.msk [vmem:[%s172 + $0x8] sm:$0xff] %vm412, %v400
        %415 = vst.msk [vmem:[%s172 + $0x10] sm:$0xff] %vm412, %v401
        %416 = vst.msk [vmem:[%s172 + $0x18] sm:$0xff] %vm412, %v402
        %417 = vst.msk [vmem:[%s172 + $0x20] sm:$0xff] %vm412, %v403
        %418 = vst.msk [vmem:[%s172 + $0x28] sm:$0xff] %vm412, %v404
        %419 = vst.msk [vmem:[%s172 + $0x30] sm:$0xff] %vm412, %v405
        %420 = vst.msk [vmem:[%s172 + $0x38] sm:$0xff] %vm412, %v406
        %421 = vst.msk [vmem:[%s172 + $0x40] sm:$0xff] %vm412, %v407
        %422 = vst.msk [vmem:[%s172 + $0x48] sm:$0xff] %vm412, %v408
        %423 = vst.msk [vmem:[%s172 + $0x50] sm:$0xff] %vm412, %v409
        %424 = vst.msk [vmem:[%s172 + $0x58] sm:$0xff] %vm412, %v410
        %425 = vst.msk [vmem:[%s172 + $0x60] sm:$0xff] %vm412, %v411
        %s426 = sand.u32 %s90, 1
        %s427 = sand.u32 %s90, 1
        %s428 = smul.addr %s427, 104
        %s429 = scalar_lea.vmem [#allocation2], %s428
        // Predicated region
        $region33: #{tpu_custom_call.1} parent=31 // pred_check
          %p430 = pneg %p100
        $region34: #{tpu_custom_call.1} parent=31 // pred_check_branch
          %432 = sbr.rel (%p430) target = $region36
        $region35: #{tpu_custom_call.1} parent=31 // pred_region
          %s433 = smul.u32 13, %s14
          %s434 = ssub.s32 25, %s433
          %p435 = scmp.lt.s32.totalorder %s434, 13
          %s436 = scalar_select %p435, %s434, 13
          %s437 = smul.u32 128, %s436
          %p438 = scmp.ne.s32.totalorder 0, %s437
          %s439 = smul.addr %s433, 8
          %s440 = scalar_lea.vmem %s3, %s439
          // Predicated region
          $region37: #{tpu_custom_call.1} parent=35 // pred_check
            %p441 = pneg %p438
          $region38: #{tpu_custom_call.1} parent=35 // pred_check_branch
            %443 = sbr.rel (%p441) target = $region40
          $region39: #{tpu_custom_call.1} parent=35 // pred_region
            // Predicated region
            $region41: #{tpu_custom_call.1} parent=39 // pred_check
              _
            $region42: #{tpu_custom_call.1} parent=39 // pred_check_branch
              %445 = sbr.rel (0) target = $region44
            $region43: #{tpu_custom_call.1} parent=39 // pred_region
              // Predicated region
              $region63: #{tpu_custom_call.1} parent=43 // pred_check
                _
              $region64: #{tpu_custom_call.1} parent=43 // pred_check_branch
                %519 = sbr.rel (0) target = $region66
              $region65: #{tpu_custom_call.1} parent=43 // pred_region
                %s520 = sdiv.u32.pop %s436, 13
                %s521 = srem.u32.pop %s436, 13
                // While loop
                $region67: #{tpu_custom_call.1} parent=65 // loop_pre_header
                  _
                $region68: #{tpu_custom_call.1} parent=65 // loop_header
                  %s523 = sphi 0, %s525
                  %p524 = scmp.ge.s32.totalorder %s523, %s520
                  %s528 = sphi 0, %s559
                  %s529 = sphi %s429, %s562
                  %s530 = sphi %s440, %s563
                $region69: #{tpu_custom_call.1} parent=65 // loop_header_branch
                  %527 = sbr.rel (%p524) target = $region73
                $region70: #{tpu_custom_call.1} parent=65 // loop_body
                  %v531 = vld [vmem:[%s529] sm:$0xff]
                  %532 = vst [vmem:[%s530] sm:$0xff] %v531
                  %v533 = vld [vmem:[%s529 + $0x8] sm:$0xff]
                  %534 = vst [vmem:[%s530 + $0x8] sm:$0xff] %v533
                  %v535 = vld [vmem:[%s529 + $0x10] sm:$0xff]
                  %536 = vst [vmem:[%s530 + $0x10] sm:$0xff] %v535
                  %v537 = vld [vmem:[%s529 + $0x18] sm:$0xff]
                  %538 = vst [vmem:[%s530 + $0x18] sm:$0xff] %v537
                  %v539 = vld [vmem:[%s529 + $0x20] sm:$0xff]
                  %540 = vst [vmem:[%s530 + $0x20] sm:$0xff] %v539
                  %v541 = vld [vmem:[%s529 + $0x28] sm:$0xff]
                  %542 = vst [vmem:[%s530 + $0x28] sm:$0xff] %v541
                  %v543 = vld [vmem:[%s529 + $0x30] sm:$0xff]
                  %544 = vst [vmem:[%s530 + $0x30] sm:$0xff] %v543
                  %v545 = vld [vmem:[%s529 + $0x38] sm:$0xff]
                  %546 = vst [vmem:[%s530 + $0x38] sm:$0xff] %v545
                  %v547 = vld [vmem:[%s529 + $0x40] sm:$0xff]
                  %548 = vst [vmem:[%s530 + $0x40] sm:$0xff] %v547
                  %v549 = vld [vmem:[%s529 + $0x48] sm:$0xff]
                  %550 = vst [vmem:[%s530 + $0x48] sm:$0xff] %v549
                  %v551 = vld [vmem:[%s529 + $0x50] sm:$0xff]
                  %552 = vst [vmem:[%s530 + $0x50] sm:$0xff] %v551
                  %v553 = vld [vmem:[%s529 + $0x58] sm:$0xff]
                  %554 = vst [vmem:[%s530 + $0x58] sm:$0xff] %v553
                  %v555 = vld [vmem:[%s529 + $0x60] sm:$0xff]
                  %556 = vst [vmem:[%s530 + $0x60] sm:$0xff] %v555
                  %s557 = sadd.s32 1, %s528
                  %p558 = scmp.ge.s32.totalorder %s557, %s520
                  %s559 = scalar_select %p558, 0, %s557
                  %s560 = smul.u32 %s559, 104
                  %s561 = smul.u32 %s559, 104
                  %s562 = scalar_lea.vmem %s429, %s560 [#allocation2]
                  %s563 = scalar_lea.vmem %s440, %s561
                $region71: #{tpu_custom_call.1} parent=65 // loop_footer
                  %s525 = sadd.s32 %s523, 1
                $region72: #{tpu_custom_call.1} parent=65 // loop_footer_branch
                  %522 = sbr.rel target = $region68
                $region73: #{tpu_custom_call.1} parent=65 // loop_exit
                  _
                %s564 = sdiv.u32.pop %s436, 13
                %s565 = srem.u32.pop %s436, 13
                %s566 = smul.u32 %s564, 13
                %s567 = smul.u32 8, %s566
                %s568 = scalar_lea.vmem %s429, %s567 [#allocation2]
                %s569 = smul.u32 8, %s566
                %s570 = scalar_lea.vmem %s440, %s569
                // While loop
                $region74: #{tpu_custom_call.1} parent=65 // loop_pre_header
                  _
                $region75: #{tpu_custom_call.1} parent=65 // loop_header
                  %s572 = sphi 0, %s574
                  %p573 = scmp.ge.s32.totalorder %s572, %s565
                  %s577 = sphi 0, %s584
                  %s578 = sphi %s568, %s587
                  %s579 = sphi %s570, %s588
                $region76: #{tpu_custom_call.1} parent=65 // loop_header_branch
                  %576 = sbr.rel (%p573) target = $region80
                $region77: #{tpu_custom_call.1} parent=65 // loop_body
                  %v580 = vld [vmem:[%s578] sm:$0xff]
                  %581 = vst [vmem:[%s579] sm:$0xff] %v580
                  %s582 = sadd.s32 1, %s577
                  %p583 = scmp.ge.s32.totalorder %s582, %s565
                  %s584 = scalar_select %p583, 0, %s582
                  %s585 = smul.u32 %s584, 8
                  %s586 = smul.u32 %s584, 8
                  %s587 = scalar_lea.vmem %s568, %s585 [#allocation2]
                  %s588 = scalar_lea.vmem %s570, %s586
                $region78: #{tpu_custom_call.1} parent=65 // loop_footer
                  %s574 = sadd.s32 %s572, 1
                $region79: #{tpu_custom_call.1} parent=65 // loop_footer_branch
                  %571 = sbr.rel target = $region75
                $region80: #{tpu_custom_call.1} parent=65 // loop_exit
                  _
              $region66: #{tpu_custom_call.1} parent=43 // pred_fallthru
                _
              // Predicated region
              $region81: #{tpu_custom_call.1} parent=43 // pred_check
                _
              $region82: #{tpu_custom_call.1} parent=43 // pred_check_branch
                %590 = sbr.rel target = $region84
              $region83: #{tpu_custom_call.1} parent=43 // pred_region
                _
              $region84: #{tpu_custom_call.1} parent=43 // pred_fallthru
                _
            $region44: #{tpu_custom_call.1} parent=39 // pred_fallthru
              _
            // Predicated region
            $region45: #{tpu_custom_call.1} parent=39 // pred_check
              _
            $region46: #{tpu_custom_call.1} parent=39 // pred_check_branch
              %447 = sbr.rel target = $region48
            $region47: #{tpu_custom_call.1} parent=39 // pred_region
              %s449 = sdiv.u32.pop %s436, 13
              %s450 = srem.u32.pop %s436, 13
              // While loop
              $region49: #{tpu_custom_call.1} parent=47 // loop_pre_header
                _
              $region50: #{tpu_custom_call.1} parent=47 // loop_header
                %s452 = sphi 0, %s454
                %p453 = scmp.ge.s32.totalorder %s452, %s449
                %s457 = sphi 0, %s488
                %s458 = sphi %s429, %s491
                %s459 = sphi %s440, %s492
              $region51: #{tpu_custom_call.1} parent=47 // loop_header_branch
                %456 = sbr.rel (%p453) target = $region55
              $region52: #{tpu_custom_call.1} parent=47 // loop_body
                %v460 = vld [vmem:[%s458] sm:$0xff]
                %461 = vst [vmem:[%s459] sm:$0xff] %v460
                %v462 = vld [vmem:[%s458 + $0x8] sm:$0xff]
                %463 = vst [vmem:[%s459 + $0x8] sm:$0xff] %v462
                %v464 = vld [vmem:[%s458 + $0x10] sm:$0xff]
                %465 = vst [vmem:[%s459 + $0x10] sm:$0xff] %v464
                %v466 = vld [vmem:[%s458 + $0x18] sm:$0xff]
                %467 = vst [vmem:[%s459 + $0x18] sm:$0xff] %v466
                %v468 = vld [vmem:[%s458 + $0x20] sm:$0xff]
                %469 = vst [vmem:[%s459 + $0x20] sm:$0xff] %v468
                %v470 = vld [vmem:[%s458 + $0x28] sm:$0xff]
                %471 = vst [vmem:[%s459 + $0x28] sm:$0xff] %v470
                %v472 = vld [vmem:[%s458 + $0x30] sm:$0xff]
                %473 = vst [vmem:[%s459 + $0x30] sm:$0xff] %v472
                %v474 = vld [vmem:[%s458 + $0x38] sm:$0xff]
                %475 = vst [vmem:[%s459 + $0x38] sm:$0xff] %v474
                %v476 = vld [vmem:[%s458 + $0x40] sm:$0xff]
                %477 = vst [vmem:[%s459 + $0x40] sm:$0xff] %v476
                %v478 = vld [vmem:[%s458 + $0x48] sm:$0xff]
                %479 = vst [vmem:[%s459 + $0x48] sm:$0xff] %v478
                %v480 = vld [vmem:[%s458 + $0x50] sm:$0xff]
                %481 = vst [vmem:[%s459 + $0x50] sm:$0xff] %v480
                %v482 = vld [vmem:[%s458 + $0x58] sm:$0xff]
                %483 = vst [vmem:[%s459 + $0x58] sm:$0xff] %v482
                %v484 = vld [vmem:[%s458 + $0x60] sm:$0xff]
                %485 = vst [vmem:[%s459 + $0x60] sm:$0xff] %v484
                %s486 = sadd.s32 1, %s457
                %p487 = scmp.ge.s32.totalorder %s486, %s449
                %s488 = scalar_select %p487, 0, %s486
                %s489 = smul.u32 %s488, 104
                %s490 = smul.u32 %s488, 104
                %s491 = scalar_lea.vmem %s429, %s489 [#allocation2]
                %s492 = scalar_lea.vmem %s440, %s490
              $region53: #{tpu_custom_call.1} parent=47 // loop_footer
                %s454 = sadd.s32 %s452, 1
              $region54: #{tpu_custom_call.1} parent=47 // loop_footer_branch
                %451 = sbr.rel target = $region50
              $region55: #{tpu_custom_call.1} parent=47 // loop_exit
                _
              %s493 = sdiv.u32.pop %s436, 13
              %s494 = srem.u32.pop %s436, 13
              %s495 = smul.u32 %s493, 13
              %s496 = smul.u32 8, %s495
              %s497 = scalar_lea.vmem %s429, %s496 [#allocation2]
              %s498 = smul.u32 8, %s495
              %s499 = scalar_lea.vmem %s440, %s498
              // While loop
              $region56: #{tpu_custom_call.1} parent=47 // loop_pre_header
                _
              $region57: #{tpu_custom_call.1} parent=47 // loop_header
                %s501 = sphi 0, %s503
                %p502 = scmp.ge.s32.totalorder %s501, %s494
                %s506 = sphi 0, %s513
                %s507 = sphi %s497, %s516
                %s508 = sphi %s499, %s517
              $region58: #{tpu_custom_call.1} parent=47 // loop_header_branch
                %505 = sbr.rel (%p502) target = $region62
              $region59: #{tpu_custom_call.1} parent=47 // loop_body
                %v509 = vld [vmem:[%s507] sm:$0xff]
                %510 = vst [vmem:[%s508] sm:$0xff] %v509
                %s511 = sadd.s32 1, %s506
                %p512 = scmp.ge.s32.totalorder %s511, %s494
                %s513 = scalar_select %p512, 0, %s511
                %s514 = smul.u32 %s513, 8
                %s515 = smul.u32 %s513, 8
                %s516 = scalar_lea.vmem %s497, %s514 [#allocation2]
                %s517 = scalar_lea.vmem %s499, %s515
              $region60: #{tpu_custom_call.1} parent=47 // loop_footer
                %s503 = sadd.s32 %s501, 1
              $region61: #{tpu_custom_call.1} parent=47 // loop_footer_branch
                %500 = sbr.rel target = $region57
              $region62: #{tpu_custom_call.1} parent=47 // loop_exit
                _
            $region48: #{tpu_custom_call.1} parent=39 // pred_fallthru
              _
          $region40: #{tpu_custom_call.1} parent=35 // pred_fallthru
            _
          %591 = vnop
        $region36: #{tpu_custom_call.1} parent=31 // pred_fallthru
          _
      $region32: #{tpu_custom_call.1} parent=5 // pred_fallthru
        _
      %p592 = scmp.le.s32.totalorder 2, %s9
      // Predicated region
      $region85: #{tpu_custom_call.1} parent=5 // pred_check
        %p593 = pneg %p592
      $region86: #{tpu_custom_call.1} parent=5 // pred_check_branch
        %595 = sbr.rel (%p593) target = $region88
      $region87: #{tpu_custom_call.1} parent=5 // pred_region
        %s596 = ssub.s32 %s9, 2
        // Predicated region
        $region89: #{tpu_custom_call.1} parent=87 // pred_check
          %p597 = pneg %p106
        $region90: #{tpu_custom_call.1} parent=87 // pred_check_branch
          %599 = sbr.rel (%p597) target = $region92
        $region91: #{tpu_custom_call.1} parent=87 // pred_region
          %s600 = sand.u32 %s91, 1
          %s601 = sand.u32 %s91, 1
          %s602 = smul.addr %s601, 104
          %s603 = scalar_lea.vmem [#allocation2], %s602
        $region92: #{tpu_custom_call.1} parent=87 // pred_fallthru
          _
      $region88: #{tpu_custom_call.1} parent=5 // pred_fallthru
        _
    $region6: #{tpu_custom_call.1} parent=1 // loop_footer
      %s13 = sadd.s32 1, %s9
    $region7: #{tpu_custom_call.1} parent=1 // loop_footer_branch
      %8 = sbr.rel target = $region3
    $region8: #{tpu_custom_call.1} parent=1 // loop_exit
      _

</llo_original>
